<compile_context>
chip_gen: v7x
topology: tpu7x:2x2x1
jax: 0.10.0
libtpu: 0.0.40
codegen_flags: <defaults>
</compile_context>

<pallas_src>
import functools

import jax
import jax.numpy as jnp
from jax.experimental import pallas as pl
from jax.experimental.pallas import tpu as pltpu

EPSILON = 1e-5


def _l2_loss_kernel(pred_ref, target_ref, out_ref, acc_ref, *, inv_n, eps):
    """Accumulate sum((target-pred)^2) over row tiles; finalize to SMEM scalar."""
    i = pl.program_id(0)

    @pl.when(i == 0)
    def _():
        acc_ref[0] = jnp.float32(0.0)

    p = pred_ref[...]
    t = target_ref[...]
    # Keep an explicit f32 cast only when needed (e.g. bf16 inputs on v5e);
    # no-op for f32 inputs.
    if p.dtype != jnp.float32:
        p = p.astype(jnp.float32)
        t = t.astype(jnp.float32)
    diff = t - p
    acc_ref[0] += jnp.sum(diff * diff)

    @pl.when(i == pl.num_programs(0) - 1)
    def _():
        # mean(sq + eps, dim=1).mean() == sum(sq)/(B*L) + eps (equal-length rows)
        out_ref[0, 0] = acc_ref[0] * inv_n + eps


def _pick_row_tile(B, max_rows=2048):
    """Largest row tile <= max_rows that divides B (multiple of 8 when tiled)."""
    if B <= max_rows:
        return B  # single block; full-extent dims satisfy the (8,128) rule
    tb = max_rows - (max_rows % 8)
    while tb >= 8:
        if B % tb == 0:
            return tb
        tb -= 8
    return B  # fallback: one full block


def l2_loss(pred, target, epsilon=EPSILON):
    """pred, target: (B, L) arrays. Returns scalar f32 loss."""
    assert pred.shape == target.shape
    B, L = pred.shape
    tb = _pick_row_tile(B)
    grid = (B // tb,)

    kernel = functools.partial(
        _l2_loss_kernel, inv_n=1.0 / float(B * L), eps=float(epsilon)
    )

    out = pl.pallas_call(
        kernel,
        out_shape=jax.ShapeDtypeStruct((1, 1), jnp.float32),
        grid=grid,
        in_specs=[
            pl.BlockSpec((tb, L), lambda i: (i, 0)),
            pl.BlockSpec((tb, L), lambda i: (i, 0)),
        ],
        # Scalar output lives in SMEM: no padded VMEM tile, no masked store,
        # no per-step HBM writeback.
        out_specs=pl.BlockSpec(memory_space=pltpu.MemorySpace.SMEM),
        scratch_shapes=[pltpu.SMEM((1,), jnp.float32)],
        compiler_params=pltpu.CompilerParams(
            # Serial accumulation into one SMEM scalar => reduction axis.
            dimension_semantics=("arbitrary",),
        ),
    )(pred, target)
    return out[0, 0]


if __name__ == "__main__":
    key = jax.random.PRNGKey(0)
    kp, kt = jax.random.split(key)
    B, L = 2, 30  # Bx30 landmarks, per the module docstring
    pred = jax.random.normal(kp, (B, L), dtype=jnp.float32)
    target = jax.random.normal(kt, (B, L), dtype=jnp.float32)

    loss = jax.block_until_ready(l2_loss(pred, target))

    # Reference check in plain JAX (same semantics as the PyTorch module).
    ref = jnp.mean(jnp.mean((target - pred) ** 2 + EPSILON, axis=1))
    assert jnp.allclose(loss, ref, rtol=1e-6, atol=1e-6), (loss, ref)

    print("KERNEL_OK")
</pallas_src>

<mosaic_0001>
module attributes {stable_mosaic.version = 11 : i64} {
  func.func @_l2_loss_kernel(%arg0: i32, %arg1: memref<2x30xf32, #tpu.memory_space<vmem>>, %arg2: memref<2x30xf32, #tpu.memory_space<vmem>>, %arg3: memref<1x1xf32, #tpu.memory_space<smem>>, %arg4: memref<1xf32, #tpu.memory_space<smem>>) attributes {dimension_semantics = [#tpu.dimension_semantics<arbitrary>], iteration_bounds = array<i64: 1>, scalar_prefetch = 0 : i64, scratch_operands = 1 : i64, tpu.core_type = #tpu.core_type<tc>, window_params = [{transform_indices = @transform_0, window_bounds = array<i64: 2, 30>}, {transform_indices = @transform_1, window_bounds = array<i64: 2, 30>}, {transform_indices = @transform_2, window_bounds = array<i64: 1, 1>}]} {
    %c0_i32 = arith.constant 0 : i32
    %0 = arith.cmpi eq, %arg0, %c0_i32 : i32
    %1 = arith.extui %0 : i1 to i32
    %c0_i32_0 = arith.constant 0 : i32
    %2 = arith.cmpi ne, %1, %c0_i32_0 : i32
    scf.if %2 {
      %cst_8 = arith.constant 0.000000e+00 : f32
      %c0_9 = arith.constant 0 : index
      %17 = memref.load %arg4[%c0_9] : memref<1xf32, #tpu.memory_space<smem>>
      memref.store %cst_8, %arg4[%c0_9] : memref<1xf32, #tpu.memory_space<smem>>
    } else {
    }
    %c0 = arith.constant 0 : index
    %c0_1 = arith.constant 0 : index
    %3 = vector.load %arg1[%c0, %c0_1] : memref<2x30xf32, #tpu.memory_space<vmem>>, vector<2x30xf32>
    %c0_2 = arith.constant 0 : index
    %c0_3 = arith.constant 0 : index
    %4 = vector.load %arg2[%c0_2, %c0_3] : memref<2x30xf32, #tpu.memory_space<vmem>>, vector<2x30xf32>
    %5 = arith.subf %4, %3 : vector<2x30xf32>
    %c0_4 = arith.constant 0 : index
    %6 = memref.load %arg4[%c0_4] : memref<1xf32, #tpu.memory_space<smem>>
    %7 = arith.mulf %5, %5 : vector<2x30xf32>
    %8 = vector.shape_cast %7 : vector<2x30xf32> to vector<1x2x30xf32>
    %cst = arith.constant dense<0.000000e+00> : vector<1xf32>
    %9 = vector.multi_reduction <add>, %8, %cst [1, 2] : vector<1x2x30xf32> to vector<1xf32>
    %10 = vector.shape_cast %9 : vector<1xf32> to vector<1x1x1xf32>
    %11 = vector.extract %10[0, 0, 0] : f32 from vector<1x1x1xf32>
    %12 = arith.addf %6, %11 : f32
    %c0_5 = arith.constant 0 : index
    %13 = memref.load %arg4[%c0_5] : memref<1xf32, #tpu.memory_space<smem>>
    memref.store %12, %arg4[%c0_5] : memref<1xf32, #tpu.memory_space<smem>>
    %c0_i32_6 = arith.constant 0 : i32
    %14 = arith.cmpi eq, %arg0, %c0_i32_6 : i32
    %15 = arith.extui %14 : i1 to i32
    %c0_i32_7 = arith.constant 0 : i32
    %16 = arith.cmpi ne, %15, %c0_i32_7 : i32
    scf.if %16 {
      %c0_8 = arith.constant 0 : index
      %17 = memref.load %arg4[%c0_8] : memref<1xf32, #tpu.memory_space<smem>>
      %cst_9 = arith.constant 0.0166666675 : f32
      %18 = arith.mulf %17, %cst_9 : f32
      %cst_10 = arith.constant 9.99999974E-6 : f32
      %19 = arith.addf %18, %cst_10 : f32
      %c0_11 = arith.constant 0 : index
      %c0_12 = arith.constant 0 : index
      %20 = memref.load %arg3[%c0_11, %c0_12] : memref<1x1xf32, #tpu.memory_space<smem>>
      memref.store %19, %arg3[%c0_11, %c0_12] : memref<1x1xf32, #tpu.memory_space<smem>>
    } else {
    }
    return
  }
  func.func @transform_0(%arg0: i32) -> (i32, i32) {
    %c0_i32 = arith.constant 0 : i32
    %c0_i32_0 = arith.constant 0 : i32
    return %arg0, %c0_i32 : i32, i32
  }
  func.func @transform_1(%arg0: i32) -> (i32, i32) {
    %c0_i32 = arith.constant 0 : i32
    %c0_i32_0 = arith.constant 0 : i32
    return %arg0, %c0_i32 : i32, i32
  }
  func.func @transform_2(%arg0: i32) -> (i32, i32) {
    %c0_i32 = arith.constant 0 : i32
    %c0_i32_0 = arith.constant 0 : i32
    %c0_i32_1 = arith.constant 0 : i32
    return %c0_i32, %c0_i32_0 : i32, i32
  }
}

</mosaic_0001>

<llo_original>
// kernel: tpu_custom_call.1
$region0: #{tpu_custom_call.1}
  #allocation0 [shape = 'u32[]', space=smem, size = 0x4, offset = 0x4, fixed_abs, tag = 'smem constant byte address 0x4 - core index']
  #allocation1 [shape = 'u32[144,128]{1,0:T(1,128)}', space=vmem, size = 0x12000, scoped, tag = 'internal scratch']
  #allocation2 [shape = 'f32[1]{0:T(128)}', space=smem, size = 0x200, scoped, tag = 'scratch operand']
  %s0 = inlined_call_operand.hbm [shape: f32[2,30], index: 0, kind: input, shape index: {}]
  %s1 = inlined_call_operand.vmem [shape: f32[2,30], index: 1, kind: input, shape index: {}]
  %s2 = inlined_call_operand.hbm [shape: f32[1,1], index: 2, kind: output, shape index: {}]
  %s3 = sld [smem:[#allocation0]]
  $region30: #{tpu_custom_call.1} parent=0
    _
  %s5 = ssub.s32 1, %s3
  %s6 = scalar_select 0, %s5, %s3
  $region1: #{tpu_custom_call.1} parent=0
    #allocation3 [shape = 'u8[1024]{0}', space=vmem, size = 0x400, scoped, tag = 'input window, operand 0, single buffered']
    #allocation4 [shape = 's32[1]{0}', space=sflag, size = 0x4, scoped, tag = 'scoped memory for tpu_custom_call.1']
    #allocation5 [shape = 's32[1]{0}', space=sflag, size = 0x4, scoped, tag = 'scoped memory for tpu_custom_call.1']
    #allocation6 [shape = 'u8[512]{0}', space=smem, size = 0x200, scoped, tag = 'output window, operand 0, single buffered']
    %7 = vsyncpa [#allocation4], 0
    %8 = vsyncpa [#allocation5], 0
    // Predicated region
    $region2: #{tpu_custom_call.1} parent=1 // pred_check
      _
    $region3: #{tpu_custom_call.1} parent=1 // pred_check_branch
      %10 = sbr.rel (0) target = $region5
    $region4: #{tpu_custom_call.1} parent=1 // pred_region
      %s12 = ssub.s32 32, 32
      %13 = vsyncadd [#allocation4], %s12
      %s15 = sshll.u32 [#allocation3], 4
      %s16 = int_to_ptr.vmem [resolvable:$true] %s15
      %18 = dma.hbm_to_vmem [thread:$0]  %s0, 32, %s16, [#allocation4]
    $region5: #{tpu_custom_call.1} parent=1 // pred_fallthru
      _
    // Predicated region
    $region6: #{tpu_custom_call.1} parent=1 // pred_check
      _
    $region7: #{tpu_custom_call.1} parent=1 // pred_check_branch
      %20 = sbr.rel (0) target = $region9
    $region8: #{tpu_custom_call.1} parent=1 // pred_region
      _
    $region9: #{tpu_custom_call.1} parent=1 // pred_fallthru
      _
    // Predicated region
    $region10: #{tpu_custom_call.1} parent=1 // pred_check
      _
    $region11: #{tpu_custom_call.1} parent=1 // pred_check_branch
      %22 = sbr.rel (0) target = $region13
    $region12: #{tpu_custom_call.1} parent=1 // pred_region
      %23 = dma.done [#allocation4], 32
    $region13: #{tpu_custom_call.1} parent=1 // pred_fallthru
      _
    %p24 = scmp.eq.s32.totalorder 0, 0
    // Predicated region
    $region14: #{tpu_custom_call.1} parent=1 // pred_check
      %p25 = pneg %p24
    $region15: #{tpu_custom_call.1} parent=1 // pred_check_branch
      %27 = sbr.rel (%p25) target = $region17
    $region16: #{tpu_custom_call.1} parent=1 // pred_region
      %s28 = scalar_lea.smem [#allocation2], 0
      %29 = sst [smem:[%s28]] 0.0
    $region17: #{tpu_custom_call.1} parent=1 // pred_fallthru
      _
    %v30 = vld [vmem:[#allocation3] sm:$0x3]
    %v31 = vld [vmem:[%s1] sm:$0x3]
    %v32 = vsub.f32 %v31, %v30
    %s33 = sld [smem:[#allocation2]]
    %v34 = vmul.f32 %v32, %v32
    %vm35 = vcmask 238592
    %v36 = vsel %vm35, %v34, 0.0
    %37 = vadd.xlane.f32.xlu0 %v36
    %v38 = vpop.xlane.xlu0 %37
    %v39 = vrot.slane %v38, 4
    %v40 = vadd.f32 %v38, %v39
    %v41 = vrot.slane %v40, 2
    %v42 = vadd.f32 %v40, %v41
    %v43 = vrot.slane %v42, 1
    %v44 = vadd.f32 %v42, %v43
    %s45 = vtos %v44
    %s46 = sadd.f32 %s33, %s45
    %s47 = scalar_lea.smem [#allocation2], 0
    %48 = sst [smem:[%s47]] %s46
    // Predicated region
    $region18: #{tpu_custom_call.1} parent=1 // pred_check
      %p49 = pneg %p24
    $region19: #{tpu_custom_call.1} parent=1 // pred_check_branch
      %51 = sbr.rel (%p49) target = $region21
    $region20: #{tpu_custom_call.1} parent=1 // pred_region
      %s52 = sld [smem:[#allocation2]]
      %s53 = smul.f32 %s52, 0.016666668
      %s54 = sadd.f32 %s53, 1e-05
      %s55 = scalar_lea.smem [#allocation6], 0
      %56 = sst [smem:[%s55]] %s54
    $region21: #{tpu_custom_call.1} parent=1 // pred_fallthru
      _
    // Predicated region
    $region22: #{tpu_custom_call.1} parent=1 // pred_check
      _
    $region23: #{tpu_custom_call.1} parent=1 // pred_check_branch
      %58 = sbr.rel (0) target = $region25
    $region24: #{tpu_custom_call.1} parent=1 // pred_region
      %s60 = ssub.s32 16, 16
      %61 = vsyncadd [#allocation5], %s60
      %64 = dma.smem_to_hbm [#allocation6], 16, %s2, [#allocation5]
    $region25: #{tpu_custom_call.1} parent=1 // pred_fallthru
      _
    // Predicated region
    $region26: #{tpu_custom_call.1} parent=1 // pred_check
      _
    $region27: #{tpu_custom_call.1} parent=1 // pred_check_branch
      %66 = sbr.rel (0) target = $region29
    $region28: #{tpu_custom_call.1} parent=1 // pred_region
      %67 = dma.done [#allocation5], 16
    $region29: #{tpu_custom_call.1} parent=1 // pred_fallthru
      _
    %68 = sfence
    %69 = vsyncpa [#allocation4], 1
    %70 = vsyncpa [#allocation5], 1

</llo_original>
